<compile_context>
chip_gen: v7x
topology: tpu7x:2x2x1
jax: 0.10.0
libtpu: 0.0.40
codegen_flags: <defaults>
</compile_context>

<pallas_src>
import jax
import jax.numpy as jnp
from jax.experimental import pallas as pl
from jax.experimental.pallas import tpu as pltpu

LANE = 128          # TPU lane width; all feature dims are padded to this.
H1, H2 = 64, 32     # logical hidden sizes of the MLP.

# Row offsets of each parameter inside the packed (SLAB_ROWS, 128) slab.
# Segments are 16-row aligned (bf16 sublane packing) so the static slices
# below never cross a packed tile boundary.
W1_OFF, B1_OFF = 0, 128
W2_OFF, B2_OFF = 144, 272
W3_OFF, B3_OFF = 288, 416
SLAB_ROWS = 432


def qnetwork_kernel(x_ref, p_ref, o_ref):
    """One (tb, 128) bf16 batch tile of x against the VMEM-resident param slab."""
    x = x_ref[...]                                         # (tb, 128) bf16

    w1 = p_ref[W1_OFF:W1_OFF + LANE, :]                    # (128, 128) bf16
    b1 = p_ref[B1_OFF:B1_OFF + 1, :].astype(jnp.float32)   # (1, 128) f32
    w2 = p_ref[W2_OFF:W2_OFF + LANE, :]
    b2 = p_ref[B2_OFF:B2_OFF + 1, :].astype(jnp.float32)
    w3 = p_ref[W3_OFF:W3_OFF + LANE, :]
    b3 = p_ref[B3_OFF:B3_OFF + 1, :].astype(jnp.float32)

    # Linear(input, 64) + ReLU   (bf16 MXU inputs, f32 accumulation/epilogue)
    h1 = jnp.dot(x, w1, preferred_element_type=jnp.float32) + b1
    h1 = jnp.maximum(h1, 0.0).astype(jnp.bfloat16)
    # Linear(64, 32) + ReLU
    h2 = jnp.dot(h1, w2, preferred_element_type=jnp.float32) + b2
    h2 = jnp.maximum(h2, 0.0).astype(jnp.bfloat16)
    # Linear(32, output)
    o_ref[...] = (jnp.dot(h2, w3, preferred_element_type=jnp.float32)
                  + b3).astype(o_ref.dtype)


def pack_params(params, input_size, output_size):
    """Pack (in,out) weights and (1,out) biases into one (432, 128) bf16 slab."""
    assert input_size <= LANE and output_size <= LANE
    slab = jnp.zeros((SLAB_ROWS, LANE), jnp.float32)
    slab = slab.at[W1_OFF:W1_OFF + input_size, :H1].set(params["w1"])
    slab = slab.at[B1_OFF, :H1].set(params["b1"].reshape(-1))
    slab = slab.at[W2_OFF:W2_OFF + H1, :H2].set(params["w2"])
    slab = slab.at[B2_OFF, :H2].set(params["b2"].reshape(-1))
    slab = slab.at[W3_OFF:W3_OFF + H2, :output_size].set(params["w3"])
    slab = slab.at[B3_OFF, :output_size].set(params["b3"].reshape(-1))
    return slab.astype(jnp.bfloat16)


def _round_up(a, m):
    return (a + m - 1) // m * m


def qnetwork_forward(x, params, *, max_row_tile=512):
    """x: (B, input_size) f32. params: dict of (in,out) weights, (1,out) biases."""
    B, input_size = x.shape
    output_size = params["w3"].shape[1]

    # Pad batch to a 16-row aligned tile (bf16 sublane packing); tile the
    # batch if it grows past max_row_tile, keeping the params VMEM-resident.
    b16 = _round_up(B, 16)
    tb = min(b16, max_row_tile)
    b_pad = _round_up(b16, tb)

    x_p = jnp.zeros((b_pad, LANE), jnp.bfloat16)
    x_p = x_p.at[:B, :input_size].set(x.astype(jnp.bfloat16))
    slab = pack_params(params, input_size, output_size)

    flops = 2 * b_pad * (LANE * LANE * 3)
    bytes_accessed = x_p.size * 2 + slab.size * 2 + b_pad * LANE * 4

    out_p = pl.pallas_call(
        qnetwork_kernel,
        out_shape=jax.ShapeDtypeStruct((b_pad, LANE), jnp.float32),
        grid=(b_pad // tb,),
        in_specs=[
            pl.BlockSpec((tb, LANE), lambda i: (i, 0)),          # batch tiles
            pl.BlockSpec((SLAB_ROWS, LANE), lambda i: (0, 0)),   # resident slab
        ],
        out_specs=pl.BlockSpec((tb, LANE), lambda i: (i, 0)),
        compiler_params=pltpu.CompilerParams(
            dimension_semantics=("parallel",)),
        cost_estimate=pl.CostEstimate(
            flops=flops, transcendentals=0, bytes_accessed=bytes_accessed),
    )(x_p, slab)

    return out_p[:B, :output_size]


def init_params(key, input_size, output_size):
    """Deterministic init mimicking PyTorch Linear default (U[-1/sqrt(fan_in), +])."""
    dims = [(input_size, 64), (64, 32), (32, output_size)]
    params = {}
    for i, (fan_in, fan_out) in enumerate(dims, start=1):
        key, kw, kb = jax.random.split(key, 3)
        bound = 1.0 / jnp.sqrt(float(fan_in))
        # stored already transposed: (in, out)
        params[f"w{i}"] = jax.random.uniform(
            kw, (fan_in, fan_out), jnp.float32, -bound, bound)
        params[f"b{i}"] = jax.random.uniform(
            kb, (1, fan_out), jnp.float32, -bound, bound)
    return params


def reference_forward(x, params):
    """Pure f32 reference (matches the PyTorch module's math)."""
    h1 = jnp.maximum(x @ params["w1"] + params["b1"], 0.0)
    h2 = jnp.maximum(h1 @ params["w2"] + params["b2"], 0.0)
    return h2 @ params["w3"] + params["b3"]


def reference_forward_bf16(x, params):
    """Reference that mimics the kernel's bf16 casts (f32 accumulation)."""
    c = lambda a: a.astype(jnp.bfloat16).astype(jnp.float32)
    h1 = jnp.maximum(c(x) @ c(params["w1"]) + c(params["b1"]), 0.0)
    h2 = jnp.maximum(c(h1) @ c(params["w2"]) + c(params["b2"]), 0.0)
    return c(h2) @ c(params["w3"]) + c(params["b3"])


if __name__ == "__main__":
    # Flappy-bird style state: small input vector, 2 actions (flap / no-flap).
    batch = 8
    input_size = 4
    output_size = 2

    key = jax.random.PRNGKey(0)
    key, kx = jax.random.split(key)
    x = jax.random.normal(kx, (batch, input_size), jnp.float32)
    params = init_params(key, input_size, output_size)

    out = qnetwork_forward(x, params)
    out = jax.block_until_ready(out)

    assert out.shape == (batch, output_size)
    # Tight check against a reference that applies the same bf16 casts.
    ref_bf16 = reference_forward_bf16(x, params)
    assert jnp.allclose(out, ref_bf16, atol=2e-3, rtol=2e-3), "mismatch vs bf16 ref"
    # Loose check against the original f32 module semantics.
    ref_f32 = reference_forward(x, params)
    assert jnp.allclose(out, ref_f32, atol=5e-2, rtol=5e-2), "mismatch vs f32 ref"

    print("KERNEL_OK")
</pallas_src>

<mosaic_0001>
module attributes {stable_mosaic.version = 11 : i64} {
  func.func @qnetwork_kernel(%arg0: i32, %arg1: memref<16x128xbf16, #tpu.memory_space<vmem>>, %arg2: memref<432x128xbf16, #tpu.memory_space<vmem>>, %arg3: memref<16x128xf32, #tpu.memory_space<vmem>>) attributes {dimension_semantics = [#tpu.dimension_semantics<parallel>], iteration_bounds = array<i64: 1>, scalar_prefetch = 0 : i64, scratch_operands = 0 : i64, tpu.core_type = #tpu.core_type<tc>, window_params = [{transform_indices = @transform_0, window_bounds = array<i64: 16, 128>}, {pipeline_mode = #tpu.pipeline_mode<synchronous>, transform_indices = @transform_1, window_bounds = array<i64: 432, 128>}, {transform_indices = @transform_2, window_bounds = array<i64: 16, 128>}]} {
    %c0 = arith.constant 0 : index
    %c0_0 = arith.constant 0 : index
    %0 = vector.load %arg1[%c0, %c0_0] : memref<16x128xbf16, #tpu.memory_space<vmem>>, vector<16x128xbf16>
    %c0_1 = arith.constant 0 : index
    %c0_2 = arith.constant 0 : index
    %1 = vector.load %arg2[%c0_1, %c0_2] : memref<432x128xbf16, #tpu.memory_space<vmem>>, vector<128x128xbf16>
    %c128 = arith.constant 128 : index
    %c0_3 = arith.constant 0 : index
    %2 = vector.load %arg2[%c128, %c0_3] : memref<432x128xbf16, #tpu.memory_space<vmem>>, vector<1x128xbf16>
    %3 = arith.extf %2 : vector<1x128xbf16> to vector<1x128xf32>
    %c144 = arith.constant 144 : index
    %c0_4 = arith.constant 0 : index
    %4 = vector.load %arg2[%c144, %c0_4] : memref<432x128xbf16, #tpu.memory_space<vmem>>, vector<128x128xbf16>
    %c272 = arith.constant 272 : index
    %c0_5 = arith.constant 0 : index
    %5 = vector.load %arg2[%c272, %c0_5] : memref<432x128xbf16, #tpu.memory_space<vmem>>, vector<1x128xbf16>
    %6 = arith.extf %5 : vector<1x128xbf16> to vector<1x128xf32>
    %c288 = arith.constant 288 : index
    %c0_6 = arith.constant 0 : index
    %7 = vector.load %arg2[%c288, %c0_6] : memref<432x128xbf16, #tpu.memory_space<vmem>>, vector<128x128xbf16>
    %c416 = arith.constant 416 : index
    %c0_7 = arith.constant 0 : index
    %8 = vector.load %arg2[%c416, %c0_7] : memref<432x128xbf16, #tpu.memory_space<vmem>>, vector<1x128xbf16>
    %9 = arith.extf %8 : vector<1x128xbf16> to vector<1x128xf32>
    %cst = arith.constant dense<0.000000e+00> : vector<16x128xf32>
    %10 = tpu.matmul %0, %1, %cst {dimension_numbers = #tpu.dot_dimension_numbers<[1], [0], [0], [1], [0, 0, 1, 1], [], []>} : vector<16x128xbf16>, vector<128x128xbf16>, vector<16x128xf32> -> vector<16x128xf32>
    %11 = vector.broadcast %3 : vector<1x128xf32> to vector<16x128xf32>
    %12 = arith.addf %10, %11 : vector<16x128xf32>
    %cst_8 = arith.constant 0.000000e+00 : f32
    %13 = vector.broadcast %cst_8 : f32 to vector<16x128xf32>
    %14 = arith.maximumf %12, %13 : vector<16x128xf32>
    %15 = arith.truncf %14 : vector<16x128xf32> to vector<16x128xbf16>
    %cst_9 = arith.constant dense<0.000000e+00> : vector<16x128xf32>
    %16 = tpu.matmul %15, %4, %cst_9 {dimension_numbers = #tpu.dot_dimension_numbers<[1], [0], [0], [1], [0, 0, 1, 1], [], []>} : vector<16x128xbf16>, vector<128x128xbf16>, vector<16x128xf32> -> vector<16x128xf32>
    %17 = vector.broadcast %6 : vector<1x128xf32> to vector<16x128xf32>
    %18 = arith.addf %16, %17 : vector<16x128xf32>
    %cst_10 = arith.constant 0.000000e+00 : f32
    %19 = vector.broadcast %cst_10 : f32 to vector<16x128xf32>
    %20 = arith.maximumf %18, %19 : vector<16x128xf32>
    %21 = arith.truncf %20 : vector<16x128xf32> to vector<16x128xbf16>
    %cst_11 = arith.constant dense<0.000000e+00> : vector<16x128xf32>
    %22 = tpu.matmul %21, %7, %cst_11 {dimension_numbers = #tpu.dot_dimension_numbers<[1], [0], [0], [1], [0, 0, 1, 1], [], []>} : vector<16x128xbf16>, vector<128x128xbf16>, vector<16x128xf32> -> vector<16x128xf32>
    %23 = vector.broadcast %9 : vector<1x128xf32> to vector<16x128xf32>
    %24 = arith.addf %22, %23 : vector<16x128xf32>
    %c0_12 = arith.constant 0 : index
    %c0_13 = arith.constant 0 : index
    %25 = vector.load %arg3[%c0_12, %c0_13] : memref<16x128xf32, #tpu.memory_space<vmem>>, vector<16x128xf32>
    tpu.vector_store %arg3[%c0_12, %c0_13], %24 {strides = array<i32>} : memref<16x128xf32, #tpu.memory_space<vmem>>, vector<16x128xf32>,
    return
  }
  func.func @transform_0(%arg0: i32) -> (i32, i32) {
    %c0_i32 = arith.constant 0 : i32
    %c0_i32_0 = arith.constant 0 : i32
    return %arg0, %c0_i32 : i32, i32
  }
  func.func @transform_1(%arg0: i32) -> (i32, i32) {
    %c0_i32 = arith.constant 0 : i32
    %c0_i32_0 = arith.constant 0 : i32
    %c0_i32_1 = arith.constant 0 : i32
    return %c0_i32, %c0_i32_0 : i32, i32
  }
  func.func @transform_2(%arg0: i32) -> (i32, i32) {
    %c0_i32 = arith.constant 0 : i32
    %c0_i32_0 = arith.constant 0 : i32
    return %arg0, %c0_i32 : i32, i32
  }
}

</mosaic_0001>

<llo_original>
// kernel: tpu_custom_call.1
$region0: #{tpu_custom_call.1}
  #allocation0 [shape = 'u32[]', space=smem, size = 0x4, offset = 0x4, fixed_abs, tag = 'smem constant byte address 0x4 - core index']
  #allocation1 [shape = 'u32[144,128]{1,0:T(1,128)}', space=vmem, size = 0x12000, scoped, tag = 'internal scratch']
  %s0 = inlined_call_operand.hbm [shape: bf16[16,128], index: 0, kind: input, shape index: {}]
  %s1 = inlined_call_operand.hbm [shape: bf16[432,128], index: 1, kind: input, shape index: {}]
  %s2 = inlined_call_operand.hbm [shape: f32[16,128], index: 2, kind: output, shape index: {}]
  %s3 = sld [smem:[#allocation0]]
  $region26: #{tpu_custom_call.1} parent=0
    _
  %s5 = ssub.s32 1, %s3
  %s6 = scalar_select 0, %s5, %s3
  $region1: #{tpu_custom_call.1} parent=0
    #allocation2 [shape = 'u8[4096]{0}', space=vmem, size = 0x1000, scoped, tag = 'input window, operand 0, single buffered']
    #allocation3 [shape = 's32[1]{0}', space=sflag, size = 0x4, scoped, tag = 'scoped memory for tpu_custom_call.1']
    #allocation4 [shape = 's32[1]{0}', space=sflag, size = 0x4, scoped, tag = 'scoped memory for tpu_custom_call.1']
    #allocation5 [shape = 'u8[110592]{0}', space=vmem, size = 0x1b000, scoped, tag = 'input window, operand 1, single buffered']
    #allocation6 [shape = 's32[1]{0}', space=sflag, size = 0x4, scoped, tag = 'scoped memory for tpu_custom_call.1']
    #allocation7 [shape = 'u8[8192]{0}', space=vmem, size = 0x2000, scoped, tag = 'output window, operand 0, single buffered']
    %7 = vsyncpa [#allocation3], 0
    %8 = vsyncpa [#allocation6], 0
    %9 = vsyncpa [#allocation4], 0
    // Predicated region
    $region2: #{tpu_custom_call.1} parent=1 // pred_check
      _
    $region3: #{tpu_custom_call.1} parent=1 // pred_check_branch
      %11 = sbr.rel (0) target = $region5
    $region4: #{tpu_custom_call.1} parent=1 // pred_region
      %s13 = ssub.s32 128, 128
      %14 = vsyncadd [#allocation3], %s13
      %s15 = sshll.u32 [#allocation2], 4
      %s16 = int_to_ptr.vmem [resolvable:$true] %s15
      %21 = dma.hbm_to_vmem [thread:$0]  %s0, 128, %s16, [#allocation3], 64, 64, 4
    $region5: #{tpu_custom_call.1} parent=1 // pred_fallthru
      _
    // Predicated region
    $region6: #{tpu_custom_call.1} parent=1 // pred_check
      _
    $region7: #{tpu_custom_call.1} parent=1 // pred_check_branch
      %23 = sbr.rel (0) target = $region9
    $region8: #{tpu_custom_call.1} parent=1 // pred_region
      %s25 = ssub.s32 3456, 3456
      %26 = vsyncadd [#allocation6], %s25
      %s27 = sshll.u32 [#allocation5], 4
      %s28 = int_to_ptr.vmem [resolvable:$true] %s27
      %33 = dma.hbm_to_vmem [thread:$0]  %s1, 3456, %s28, [#allocation6], 64, 64, 4
    $region9: #{tpu_custom_call.1} parent=1 // pred_fallthru
      _
    // Predicated region
    $region10: #{tpu_custom_call.1} parent=1 // pred_check
      _
    $region11: #{tpu_custom_call.1} parent=1 // pred_check_branch
      %35 = sbr.rel (0) target = $region13
    $region12: #{tpu_custom_call.1} parent=1 // pred_region
      %36 = dma.done [#allocation3], 128
    $region13: #{tpu_custom_call.1} parent=1 // pred_fallthru
      _
    // Predicated region
    $region14: #{tpu_custom_call.1} parent=1 // pred_check
      _
    $region15: #{tpu_custom_call.1} parent=1 // pred_check_branch
      %38 = sbr.rel (0) target = $region17
    $region16: #{tpu_custom_call.1} parent=1 // pred_region
      %39 = dma.done [#allocation6], 3456
    $region17: #{tpu_custom_call.1} parent=1 // pred_fallthru
      _
    %v41 = vld [vmem:[#allocation2] sm:$0xf]
    %v42 = vld [vmem:[#allocation2 + $0x4] sm:$0xf]
    %v43 = vld [vmem:[#allocation5] sm:$0xf]
    %v44 = vld [vmem:[#allocation5 + $0x4] sm:$0xf]
    %v45 = vld [vmem:[#allocation5 + $0x8] sm:$0xf]
    %v46 = vld [vmem:[#allocation5 + $0xc] sm:$0xf]
    %v47 = vld [vmem:[#allocation5 + $0x10] sm:$0xf]
    %v48 = vld [vmem:[#allocation5 + $0x14] sm:$0xf]
    %v49 = vld [vmem:[#allocation5 + $0x18] sm:$0xf]
    %v50 = vld [vmem:[#allocation5 + $0x1c] sm:$0xf]
    %v51 = vld [vmem:[#allocation5 + $0x20] sm:$0xf]
    %v52 = vld [vmem:[#allocation5 + $0x24] sm:$0xf]
    %v53 = vld [vmem:[#allocation5 + $0x28] sm:$0xf]
    %v54 = vld [vmem:[#allocation5 + $0x2c] sm:$0xf]
    %v55 = vld [vmem:[#allocation5 + $0x30] sm:$0xf]
    %v56 = vld [vmem:[#allocation5 + $0x34] sm:$0xf]
    %v57 = vld [vmem:[#allocation5 + $0x38] sm:$0xf]
    %v58 = vld [vmem:[#allocation5 + $0x3c] sm:$0xf]
    %v59 = vld [vmem:[#allocation5 + $0x40] sm:$0x1]
    %v60 = vunpack.c.l.bf16 %v59
    %v61 = vld [vmem:[#allocation5 + $0x48] sm:$0xf]
    %v62 = vld [vmem:[#allocation5 + $0x4c] sm:$0xf]
    %v63 = vld [vmem:[#allocation5 + $0x50] sm:$0xf]
    %v64 = vld [vmem:[#allocation5 + $0x54] sm:$0xf]
    %v65 = vld [vmem:[#allocation5 + $0x58] sm:$0xf]
    %v66 = vld [vmem:[#allocation5 + $0x5c] sm:$0xf]
    %v67 = vld [vmem:[#allocation5 + $0x60] sm:$0xf]
    %v68 = vld [vmem:[#allocation5 + $0x64] sm:$0xf]
    %v69 = vld [vmem:[#allocation5 + $0x68] sm:$0xf]
    %v70 = vld [vmem:[#allocation5 + $0x6c] sm:$0xf]
    %v71 = vld [vmem:[#allocation5 + $0x70] sm:$0xf]
    %v72 = vld [vmem:[#allocation5 + $0x74] sm:$0xf]
    %v73 = vld [vmem:[#allocation5 + $0x78] sm:$0xf]
    %v74 = vld [vmem:[#allocation5 + $0x7c] sm:$0xf]
    %v75 = vld [vmem:[#allocation5 + $0x80] sm:$0xf]
    %v76 = vld [vmem:[#allocation5 + $0x84] sm:$0xf]
    %v77 = vld [vmem:[#allocation5 + $0x88] sm:$0x1]
    %v78 = vunpack.c.l.bf16 %v77
    %v79 = vld [vmem:[#allocation5 + $0x90] sm:$0xf]
    %v80 = vld [vmem:[#allocation5 + $0x94] sm:$0xf]
    %v81 = vld [vmem:[#allocation5 + $0x98] sm:$0xf]
    %v82 = vld [vmem:[#allocation5 + $0x9c] sm:$0xf]
    %v83 = vld [vmem:[#allocation5 + $0xa0] sm:$0xf]
    %v84 = vld [vmem:[#allocation5 + $0xa4] sm:$0xf]
    %v85 = vld [vmem:[#allocation5 + $0xa8] sm:$0xf]
    %v86 = vld [vmem:[#allocation5 + $0xac] sm:$0xf]
    %v87 = vld [vmem:[#allocation5 + $0xb0] sm:$0xf]
    %v88 = vld [vmem:[#allocation5 + $0xb4] sm:$0xf]
    %v89 = vld [vmem:[#allocation5 + $0xb8] sm:$0xf]
    %v90 = vld [vmem:[#allocation5 + $0xbc] sm:$0xf]
    %v91 = vld [vmem:[#allocation5 + $0xc0] sm:$0xf]
    %v92 = vld [vmem:[#allocation5 + $0xc4] sm:$0xf]
    %v93 = vld [vmem:[#allocation5 + $0xc8] sm:$0xf]
    %v94 = vld [vmem:[#allocation5 + $0xcc] sm:$0xf]
    %v95 = vld [vmem:[#allocation5 + $0xd0] sm:$0x1]
    %v96 = vunpack.c.l.bf16 %v95
    %v97 = vlaneseq
    %v98 = vshrl.u32 %v97, 7
    %v99 = vsub.s32 0, %v98
    %v100 = vrot.slane %v60, %v99
    %v103 = vunpack.c.l.b16 %v41
    %v104 = vunpack.c.l.b16 %v42
    %v105 = vpack.c.b16 %v104, %v103
    %v123 = vunpack.c.l.b16 %v43
    %v124 = vunpack.c.l.b16 %v44
    %v125 = vunpack.c.l.b16 %v45
    %v126 = vunpack.c.l.b16 %v46
    %v127 = vunpack.c.l.b16 %v47
    %v128 = vunpack.c.l.b16 %v48
    %v129 = vunpack.c.l.b16 %v49
    %v130 = vunpack.c.l.b16 %v50
    %v131 = vunpack.c.l.b16 %v51
    %v132 = vunpack.c.l.b16 %v52
    %v133 = vunpack.c.l.b16 %v53
    %v134 = vunpack.c.l.b16 %v54
    %v135 = vunpack.c.l.b16 %v55
    %v136 = vunpack.c.l.b16 %v56
    %v137 = vunpack.c.l.b16 %v57
    %v138 = vunpack.c.l.b16 %v58
    %v139 = vpack.c.b16 %v124, %v123
    %v140 = vpack.c.b16 %v126, %v125
    %v141 = vpack.c.b16 %v128, %v127
    %v142 = vpack.c.b16 %v130, %v129
    %v143 = vpack.c.b16 %v132, %v131
    %v144 = vpack.c.b16 %v134, %v133
    %v145 = vpack.c.b16 %v136, %v135
    %v146 = vpack.c.b16 %v138, %v137
    %155 = vmatprep.subr.bf16.mxu0 0
    %156 = vmatpush1.bf16.msra.mxu0 %v139
    %157 = vmatprep.subr.bf16.mxu0 0
    %158 = vmatpush1.bf16.msra.mxu0 %v140
    %159 = vmatprep.subr.bf16.mxu0 0
    %160 = vmatpush1.bf16.msra.mxu0 %v141
    %161 = vmatprep.subr.bf16.mxu0 0
    %162 = vmatpush1.bf16.msra.mxu0 %v142
    %163 = vmatprep.subr.bf16.mxu0 0
    %164 = vmatpush1.bf16.msra.mxu0 %v143
    %165 = vmatprep.subr.bf16.mxu0 0
    %166 = vmatpush1.bf16.msra.mxu0 %v144
    %167 = vmatprep.subr.bf16.mxu0 0
    %168 = vmatpush1.bf16.msra.mxu0 %v145
    %169 = vmatprep.subr.bf16.mxu0 0
    %170 = vmatpush1.bf16.msra.mxu0 %v146
    %171 = vmatprep.subr.bf16.mxu0 0
    %172 = vmatpush1.bf16.msra.mxu0 0
    %173 = vmatprep.subr.bf16.mxu0 0
    %174 = vmatpush1.bf16.msra.mxu0 0
    %175 = vmatprep.subr.bf16.mxu0 0
    %176 = vmatpush1.bf16.msra.mxu0 0
    %177 = vmatprep.subr.bf16.mxu0 0
    %178 = vmatpush1.bf16.msra.mxu0 0
    %179 = vmatprep.subr.bf16.mxu0 0
    %180 = vmatpush1.bf16.msra.mxu0 0
    %181 = vmatprep.subr.bf16.mxu0 0
    %182 = vmatpush1.bf16.msra.mxu0 0
    %183 = vmatprep.subr.bf16.mxu0 0
    %184 = vmatpush1.bf16.msra.mxu0 0
    %185 = vmatprep.subr.bf16.mxu0 0
    %186 = vmatpush1.bf16.msra.mxu0 0
    %187 = vmatprep.mubr.bf16.mxu0 0
    %188 = vmatmul.mubr.bf16.gmra.mrb[0].mxu0 %v105
    %v189 = vpop.f32.mrb[0].mxu0
    %v190 = vadd.f32 %v100, %v189
    %v191 = vpop.f32.mrb[0].mxu0
    %v192 = vpop.f32.mrb[0].mxu0
    %v193 = vadd.f32 %v100, %v192
    %v194 = vpop.f32.mrb[0].mxu0
    %195 = vdwg.mxu0
    %v196 = vmax.f32 %v190, 0.0
    %v197 = vmax.f32 %v193, 0.0
    %v198 = vpack.c.bf16 %v197, %v196
    %v199 = vlaneseq
    %v200 = vshrl.u32 %v199, 7
    %v201 = vsub.s32 0, %v200
    %v202 = vrot.slane %v78, %v201
    %v219 = vunpack.c.l.b16 %v61
    %v220 = vunpack.c.l.b16 %v62
    %v221 = vunpack.c.l.b16 %v63
    %v222 = vunpack.c.l.b16 %v64
    %v223 = vunpack.c.l.b16 %v65
    %v224 = vunpack.c.l.b16 %v66
    %v225 = vunpack.c.l.b16 %v67
    %v226 = vunpack.c.l.b16 %v68
    %v227 = vunpack.c.l.b16 %v69
    %v228 = vunpack.c.l.b16 %v70
    %v229 = vunpack.c.l.b16 %v71
    %v230 = vunpack.c.l.b16 %v72
    %v231 = vunpack.c.l.b16 %v73
    %v232 = vunpack.c.l.b16 %v74
    %v233 = vunpack.c.l.b16 %v75
    %v234 = vunpack.c.l.b16 %v76
    %v235 = vpack.c.b16 %v220, %v219
    %v236 = vpack.c.b16 %v222, %v221
    %v237 = vpack.c.b16 %v224, %v223
    %v238 = vpack.c.b16 %v226, %v225
    %v239 = vpack.c.b16 %v228, %v227
    %v240 = vpack.c.b16 %v230, %v229
    %v241 = vpack.c.b16 %v232, %v231
    %v242 = vpack.c.b16 %v234, %v233
    %251 = vmatprep.subr.bf16.mxu0 0
    %252 = vmatpush1.bf16.msra.mxu0 %v235
    %253 = vmatprep.subr.bf16.mxu0 0
    %254 = vmatpush1.bf16.msra.mxu0 %v236
    %255 = vmatprep.subr.bf16.mxu0 0
    %256 = vmatpush1.bf16.msra.mxu0 %v237
    %257 = vmatprep.subr.bf16.mxu0 0
    %258 = vmatpush1.bf16.msra.mxu0 %v238
    %259 = vmatprep.subr.bf16.mxu0 0
    %260 = vmatpush1.bf16.msra.mxu0 %v239
    %261 = vmatprep.subr.bf16.mxu0 0
    %262 = vmatpush1.bf16.msra.mxu0 %v240
    %263 = vmatprep.subr.bf16.mxu0 0
    %264 = vmatpush1.bf16.msra.mxu0 %v241
    %265 = vmatprep.subr.bf16.mxu0 0
    %266 = vmatpush1.bf16.msra.mxu0 %v242
    %267 = vmatprep.subr.bf16.mxu0 0
    %268 = vmatpush1.bf16.msra.mxu0 0
    %269 = vmatprep.subr.bf16.mxu0 0
    %270 = vmatpush1.bf16.msra.mxu0 0
    %271 = vmatprep.subr.bf16.mxu0 0
    %272 = vmatpush1.bf16.msra.mxu0 0
    %273 = vmatprep.subr.bf16.mxu0 0
    %274 = vmatpush1.bf16.msra.mxu0 0
    %275 = vmatprep.subr.bf16.mxu0 0
    %276 = vmatpush1.bf16.msra.mxu0 0
    %277 = vmatprep.subr.bf16.mxu0 0
    %278 = vmatpush1.bf16.msra.mxu0 0
    %279 = vmatprep.subr.bf16.mxu0 0
    %280 = vmatpush1.bf16.msra.mxu0 0
    %281 = vmatprep.subr.bf16.mxu0 0
    %282 = vmatpush1.bf16.msra.mxu0 0
    %283 = vmatprep.mubr.bf16.mxu0 0
    %284 = vmatmul.mubr.bf16.gmra.mrb[0].mxu0 %v198
    %v285 = vpop.f32.mrb[0].mxu0
    %v286 = vadd.f32 %v202, %v285
    %v287 = vpop.f32.mrb[0].mxu0
    %v288 = vpop.f32.mrb[0].mxu0
    %v289 = vadd.f32 %v202, %v288
    %v290 = vpop.f32.mrb[0].mxu0
    %291 = vdwg.mxu0
    %v292 = vmax.f32 %v286, 0.0
    %v293 = vmax.f32 %v289, 0.0
    %v294 = vpack.c.bf16 %v293, %v292
    %v295 = vlaneseq
    %v296 = vshrl.u32 %v295, 7
    %v297 = vsub.s32 0, %v296
    %v298 = vrot.slane %v96, %v297
    %v315 = vunpack.c.l.b16 %v79
    %v316 = vunpack.c.l.b16 %v80
    %v317 = vunpack.c.l.b16 %v81
    %v318 = vunpack.c.l.b16 %v82
    %v319 = vunpack.c.l.b16 %v83
    %v320 = vunpack.c.l.b16 %v84
    %v321 = vunpack.c.l.b16 %v85
    %v322 = vunpack.c.l.b16 %v86
    %v323 = vunpack.c.l.b16 %v87
    %v324 = vunpack.c.l.b16 %v88
    %v325 = vunpack.c.l.b16 %v89
    %v326 = vunpack.c.l.b16 %v90
    %v327 = vunpack.c.l.b16 %v91
    %v328 = vunpack.c.l.b16 %v92
    %v329 = vunpack.c.l.b16 %v93
    %v330 = vunpack.c.l.b16 %v94
    %v331 = vpack.c.b16 %v316, %v315
    %v332 = vpack.c.b16 %v318, %v317
    %v333 = vpack.c.b16 %v320, %v319
    %v334 = vpack.c.b16 %v322, %v321
    %v335 = vpack.c.b16 %v324, %v323
    %v336 = vpack.c.b16 %v326, %v325
    %v337 = vpack.c.b16 %v328, %v327
    %v338 = vpack.c.b16 %v330, %v329
    %347 = vmatprep.subr.bf16.mxu0 0
    %348 = vmatpush1.bf16.msra.mxu0 %v331
    %349 = vmatprep.subr.bf16.mxu0 0
    %350 = vmatpush1.bf16.msra.mxu0 %v332
    %351 = vmatprep.subr.bf16.mxu0 0
    %352 = vmatpush1.bf16.msra.mxu0 %v333
    %353 = vmatprep.subr.bf16.mxu0 0
    %354 = vmatpush1.bf16.msra.mxu0 %v334
    %355 = vmatprep.subr.bf16.mxu0 0
    %356 = vmatpush1.bf16.msra.mxu0 %v335
    %357 = vmatprep.subr.bf16.mxu0 0
    %358 = vmatpush1.bf16.msra.mxu0 %v336
    %359 = vmatprep.subr.bf16.mxu0 0
    %360 = vmatpush1.bf16.msra.mxu0 %v337
    %361 = vmatprep.subr.bf16.mxu0 0
    %362 = vmatpush1.bf16.msra.mxu0 %v338
    %363 = vmatprep.subr.bf16.mxu0 0
    %364 = vmatpush1.bf16.msra.mxu0 0
    %365 = vmatprep.subr.bf16.mxu0 0
    %366 = vmatpush1.bf16.msra.mxu0 0
    %367 = vmatprep.subr.bf16.mxu0 0
    %368 = vmatpush1.bf16.msra.mxu0 0
    %369 = vmatprep.subr.bf16.mxu0 0
    %370 = vmatpush1.bf16.msra.mxu0 0
    %371 = vmatprep.subr.bf16.mxu0 0
    %372 = vmatpush1.bf16.msra.mxu0 0
    %373 = vmatprep.subr.bf16.mxu0 0
    %374 = vmatpush1.bf16.msra.mxu0 0
    %375 = vmatprep.subr.bf16.mxu0 0
    %376 = vmatpush1.bf16.msra.mxu0 0
    %377 = vmatprep.subr.bf16.mxu0 0
    %378 = vmatpush1.bf16.msra.mxu0 0
    %379 = vmatprep.mubr.bf16.mxu0 0
    %380 = vmatmul.mubr.bf16.gmra.mrb[0].mxu0 %v294
    %v381 = vpop.f32.mrb[0].mxu0
    %v382 = vadd.f32 %v298, %v381
    %v383 = vpop.f32.mrb[0].mxu0
    %v384 = vpop.f32.mrb[0].mxu0
    %v385 = vadd.f32 %v298, %v384
    %v386 = vpop.f32.mrb[0].mxu0
    %387 = vdwg.mxu0
    %388 = vst [vmem:[#allocation7] sm:$0xff] %v382
    %389 = vst [vmem:[#allocation7 + $0x8] sm:$0xff] %v385
    // Predicated region
    $region18: #{tpu_custom_call.1} parent=1 // pred_check
      _
    $region19: #{tpu_custom_call.1} parent=1 // pred_check_branch
      %391 = sbr.rel (0) target = $region21
    $region20: #{tpu_custom_call.1} parent=1 // pred_region
      %s393 = ssub.s32 256, 256
      %394 = vsyncadd [#allocation4], %s393
      %s395 = sshll.u32 [#allocation7], 4
      %s396 = int_to_ptr.vmem [resolvable:$true] %s395
      %401 = dma.vmem_to_hbm [thread:$0]  %s396, 256, %s2, [#allocation4], 128, 128, 8
    $region21: #{tpu_custom_call.1} parent=1 // pred_fallthru
      _
    // Predicated region
    $region22: #{tpu_custom_call.1} parent=1 // pred_check
      _
    $region23: #{tpu_custom_call.1} parent=1 // pred_check_branch
      %403 = sbr.rel (0) target = $region25
    $region24: #{tpu_custom_call.1} parent=1 // pred_region
      %404 = dma.done [#allocation4], 256
    $region25: #{tpu_custom_call.1} parent=1 // pred_fallthru
      _
    %405 = vsyncpa [#allocation3], 1
    %406 = vsyncpa [#allocation6], 1
    %407 = vsyncpa [#allocation4], 1

</llo_original>
